<compile_context>
chip_gen: v7x
topology: tpu7x:2x2x1
jax: 0.10.0
libtpu: 0.0.40
codegen_flags: <defaults>
</compile_context>

<pallas_src>
import jax
import jax.numpy as jnp
from jax.experimental import pallas as pl
from jax.experimental.pallas import tpu as pltpu


# ----------------------------------------------------------------------------
# Pallas kernel: residual block for one block of BB whole (padded) sequences.
# ----------------------------------------------------------------------------
def _res_conv1d_kernel(x_ref,     # (R, Cin)    flat padded input rows, channels-last
                       w1s_ref,   # (Cin, 4*C)  conv1 taps 0..2 + 1x1 shortcut (BN scale folded)
                       t1_ref,    # (1, C)      conv1 bias + BN1 shift
                       w2s_ref,   # (C, 3*C)    conv2 taps 0..2 (BN scale folded)
                       t2_ref,    # (1, C)      conv2 bias + BN2 shift
                       ts_ref,    # (1, C)      shortcut bias + BN shift
                       m_ref,     # (R, 1)      1.0 on data rows, 0.0 on pad rows
                       o_ref,     # (R, C)      output rows (same padded row layout)
                       h_ref):    # (R, C)      VMEM scratch: zero-padded conv1 activation
    R, C = o_ref.shape

    x = x_ref[...]                                                        # (R, Cin)

    # conv1 (k=3, p=1) + 1x1 shortcut in a single MXU call: weights are N-stacked
    # per tap; the tap sum becomes a shifted add of output column groups.
    z1 = jnp.dot(x, w1s_ref[...], preferred_element_type=jnp.float32)    # (R, 4C)
    raw1 = (z1[0:R - 2, 0:C]             # tap 0  -> x[row-1]
            + z1[1:R - 1, C:2 * C]       # tap 1  -> x[row]
            + z1[2:R, 2 * C:3 * C])      # tap 2  -> x[row+1]
    shortcut = z1[1:R - 1, 3 * C:4 * C]  # 1x1 conv -> x[row]

    # BN1 (scale folded into weights) + ReLU; mask pad rows so conv2's halo
    # reads see true zero padding.
    m = m_ref[...]                                                        # (R, 1)
    h_body = jnp.maximum(raw1 + t1_ref[...], 0.0) * m[1:R - 1, :]         # (R-2, C)

    # Stage the zero-padded activation in persistent VMEM scratch. Only the two
    # edge rows ever need explicit zeros (interior pad rows are masked above).
    zrow = jnp.zeros((1, C), jnp.float32)
    h_ref[pl.ds(0, 1), :] = zrow
    h_ref[pl.ds(R - 1, 1), :] = zrow
    h_ref[pl.ds(1, R - 2), :] = h_body
    h = h_ref[...]                                                        # (R, C)

    # conv2 (k=3, p=1), same single-matmul structure.
    z2 = jnp.dot(h, w2s_ref[...], preferred_element_type=jnp.float32)     # (R, 3C)
    raw2 = z2[0:R - 2, 0:C] + z2[1:R - 1, C:2 * C] + z2[2:R, 2 * C:3 * C]

    # BN2 + residual add + final ReLU.
    out = jnp.maximum(raw2 + t2_ref[...] + shortcut + ts_ref[...], 0.0)   # (R-2, C)

    o_ref[pl.ds(0, 1), :] = zrow
    o_ref[pl.ds(R - 1, 1), :] = zrow
    o_ref[pl.ds(1, R - 2), :] = out


# ----------------------------------------------------------------------------
# Wrapper: layout / padding / BN folding in plain JAX + pallas_call.
# ----------------------------------------------------------------------------
def _round_up(x, m):
    return ((x + m - 1) // m) * m


def _pick_batch_block(B, P, cin, cout):
    """Sequences per grid step: big enough to amortize the ~0.35us per-step
    overhead, small enough to stay well inside scoped VMEM, and >=2 grid steps
    when B >= 2 so both v7x TensorCores get work."""
    bytes_per_row = 4 * (2 * cin + 12 * cout)          # x, z1, z2, scratch, out (f32, rough)
    target_rows = max(P, min(4096, (8 << 20) // max(bytes_per_row, 1)))
    cap = min(max(1, target_rows // P), B)
    if B >= 2:
        cap = max(1, min(cap, B // 2))
    # largest divisor of B not exceeding cap (keeps every block full).
    return max(d for d in range(1, cap + 1) if B % d == 0)


def res_conv1d(x_ncl, params, eps=1e-5):
    """x_ncl: (B, C_in, L) float32, NCL like the PyTorch module. Returns (B, C_out, L)."""
    B, Cin, L = x_ncl.shape
    w1, b1, g1, be1, m1, v1 = params["conv1"]
    w2, b2, g2, be2, m2, v2 = params["conv2"]
    ws, bs, gs, bes, ms, vs = params["short"]
    Cout = w1.shape[0]

    P = _round_up(L + 2, 8)                  # per-sequence padded row count (8-aligned)
    BB = _pick_batch_block(B, P, Cin, Cout)  # sequences per grid step
    R = BB * P                               # rows per grid step
    grid = B // BB

    # ---- fold BN (eval mode) + conv bias; fold the scale into the weights.
    def fold(bias, gamma, beta, mean, var):
        s = gamma / jnp.sqrt(var + eps)
        return s, (bias - mean) * s + beta

    s1, t1 = fold(b1, g1, be1, m1, v1)
    s2, t2 = fold(b2, g2, be2, m2, v2)
    ss, ts = fold(bs, gs, bes, ms, vs)

    # torch conv weight (Cout, Cin, k) -> per-tap (Cin, Cout), scale folded,
    # taps (+ the 1x1 shortcut) stacked along N so each conv is one matmul.
    w1_taps = [(w1[:, :, t].T * s1[None, :]) for t in range(3)]
    ws_f = ws[:, :, 0].T * ss[None, :]
    w1s = jnp.concatenate(w1_taps + [ws_f], axis=1).astype(jnp.float32)   # (Cin, 4*Cout)
    w2_taps = [(w2[:, :, t].T * s2[None, :]) for t in range(3)]
    w2s = jnp.concatenate(w2_taps, axis=1).astype(jnp.float32)            # (Cout, 3*Cout)

    t1r = t1[None, :].astype(jnp.float32)
    t2r = t2[None, :].astype(jnp.float32)
    tsr = ts[None, :].astype(jnp.float32)

    # ---- layout: NCL -> channels-last, pad each sequence to P rows
    #      ([1 zero | L data | zeros]) and flatten (B, P) into the matmul M dim.
    x_lc = jnp.transpose(x_ncl, (0, 2, 1)).astype(jnp.float32)            # (B, L, Cin)
    x_flat = jnp.pad(x_lc, ((0, 0), (1, P - 1 - L), (0, 0))).reshape(B * P, Cin)

    # per-row validity mask; identical for every block since R is a multiple of P.
    pos = jnp.arange(R) % P
    row_mask = ((pos >= 1) & (pos <= L)).astype(jnp.float32)[:, None]     # (R, 1)

    const = lambda shape: pl.BlockSpec(shape, lambda b: (0,) * len(shape))

    out_flat = pl.pallas_call(
        _res_conv1d_kernel,
        out_shape=jax.ShapeDtypeStruct((B * P, Cout), jnp.float32),
        grid_spec=pltpu.PrefetchScalarGridSpec(
            num_scalar_prefetch=0,
            grid=(grid,),
            in_specs=[
                pl.BlockSpec((R, Cin), lambda b: (b, 0)),   # input rows
                const((Cin, 4 * Cout)),                     # fused conv1 + shortcut weights
                const((1, Cout)),                           # t1
                const((Cout, 3 * Cout)),                    # fused conv2 weights
                const((1, Cout)),                           # t2
                const((1, Cout)),                           # ts
                const((R, 1)),                              # row mask
            ],
            out_specs=pl.BlockSpec((R, Cout), lambda b: (b, 0)),
            scratch_shapes=[pltpu.VMEM((R, Cout), jnp.float32)],
        ),
        compiler_params=pltpu.CompilerParams(dimension_semantics=("parallel",)),
    )(x_flat, w1s, t1r, w2s, t2r, tsr, row_mask)

    # drop pad rows, back to NCL (slice + transpose fuse into one XLA copy).
    out = out_flat.reshape(B, P, Cout)[:, 1:L + 1, :]                     # (B, L, Cout)
    return jnp.transpose(out, (0, 2, 1))                                  # (B, Cout, L)


# ----------------------------------------------------------------------------
# Pure-JAX reference (mirrors the PyTorch forward, eval-mode BN), for checking.
# ----------------------------------------------------------------------------
def _conv1d_ref(x, w, b, stride=1, padding=1):
    y = jax.lax.conv_general_dilated(
        x, w, window_strides=(stride,), padding=[(padding, padding)],
        dimension_numbers=("NCH", "OIH", "NCH"))
    return y + b[None, :, None]


def _bn_ref(x, gamma, beta, mean, var, eps=1e-5):
    return (x - mean[None, :, None]) / jnp.sqrt(var[None, :, None] + eps) \
        * gamma[None, :, None] + beta[None, :, None]


def res_conv1d_ref(x, params):
    w1, b1, g1, be1, m1, v1 = params["conv1"]
    w2, b2, g2, be2, m2, v2 = params["conv2"]
    ws, bs, gs, bes, ms, vs = params["short"]
    h = jnp.maximum(_bn_ref(_conv1d_ref(x, w1, b1), g1, be1, m1, v1), 0.0)
    out = _bn_ref(_conv1d_ref(h, w2, b2), g2, be2, m2, v2)
    sc = _bn_ref(_conv1d_ref(x, ws, bs, padding=0), gs, bes, ms, vs)
    return jnp.maximum(out + sc, 0.0)


# ----------------------------------------------------------------------------
def _make_params(key, cin, cout, k=3):
    ks = jax.random.split(key, 12)

    def bn_params(k1, k2, k3, c):
        gamma = 1.0 + 0.1 * jax.random.normal(k1, (c,), jnp.float32)
        beta = 0.1 * jax.random.normal(k2, (c,), jnp.float32)
        mean = 0.1 * jax.random.normal(k3, (c,), jnp.float32)
        var = jnp.abs(0.2 * jax.random.normal(k3, (c,), jnp.float32)) + 0.5
        return gamma, beta, mean, var

    w1 = 0.3 * jax.random.normal(ks[0], (cout, cin, k), jnp.float32)
    b1 = 0.1 * jax.random.normal(ks[1], (cout,), jnp.float32)
    w2 = 0.3 * jax.random.normal(ks[2], (cout, cout, k), jnp.float32)
    b2 = 0.1 * jax.random.normal(ks[3], (cout,), jnp.float32)
    ws = 0.3 * jax.random.normal(ks[4], (cout, cin, 1), jnp.float32)
    bs = 0.1 * jax.random.normal(ks[5], (cout,), jnp.float32)

    return {
        "conv1": (w1, b1, *bn_params(ks[6], ks[7], ks[8], cout)),
        "conv2": (w2, b2, *bn_params(ks[9], ks[10], ks[11], cout)),
        "short": (ws, bs, *bn_params(ks[7], ks[9], ks[11], cout)),
    }


if __name__ == "__main__":
    key = jax.random.PRNGKey(0)
    k_x, k_p = jax.random.split(key)

    B, Cin, Cout, L = 2, 4, 8, 16
    x = jax.random.normal(k_x, (B, Cin, L), jnp.float32)   # NCL, like PyTorch
    params = _make_params(k_p, Cin, Cout)

    out = jax.block_until_ready(res_conv1d(x, params))
    ref = jax.block_until_ready(res_conv1d_ref(x, params))

    assert out.shape == (B, Cout, L), out.shape
    assert jnp.allclose(out, ref, rtol=1e-4, atol=1e-4), \
        f"max abs err {jnp.max(jnp.abs(out - ref))}"

    print("KERNEL_OK")
</pallas_src>

<mosaic_0001>
module attributes {stable_mosaic.version = 11 : i64} {
  func.func @_res_conv1d_kernel(%arg0: i32, %arg1: memref<24x4xf32, #tpu.memory_space<vmem>>, %arg2: memref<4x32xf32, #tpu.memory_space<vmem>>, %arg3: memref<1x8xf32, #tpu.memory_space<vmem>>, %arg4: memref<8x24xf32, #tpu.memory_space<vmem>>, %arg5: memref<1x8xf32, #tpu.memory_space<vmem>>, %arg6: memref<1x8xf32, #tpu.memory_space<vmem>>, %arg7: memref<24x1xf32, #tpu.memory_space<vmem>>, %arg8: memref<24x8xf32, #tpu.memory_space<vmem>>, %arg9: memref<24x8xf32, #tpu.memory_space<vmem>>) attributes {dimension_semantics = [#tpu.dimension_semantics<parallel>], iteration_bounds = array<i64: 2>, scalar_prefetch = 0 : i64, scratch_operands = 1 : i64, tpu.core_type = #tpu.core_type<tc>, window_params = [{transform_indices = @transform_0, window_bounds = array<i64: 24, 4>}, {pipeline_mode = #tpu.pipeline_mode<synchronous>, transform_indices = @transform_1, window_bounds = array<i64: 4, 32>}, {pipeline_mode = #tpu.pipeline_mode<synchronous>, transform_indices = @transform_2, window_bounds = array<i64: 1, 8>}, {pipeline_mode = #tpu.pipeline_mode<synchronous>, transform_indices = @transform_3, window_bounds = array<i64: 8, 24>}, {pipeline_mode = #tpu.pipeline_mode<synchronous>, transform_indices = @transform_4, window_bounds = array<i64: 1, 8>}, {pipeline_mode = #tpu.pipeline_mode<synchronous>, transform_indices = @transform_5, window_bounds = array<i64: 1, 8>}, {pipeline_mode = #tpu.pipeline_mode<synchronous>, transform_indices = @transform_6, window_bounds = array<i64: 24, 1>}, {transform_indices = @transform_7, window_bounds = array<i64: 24, 8>}]} {
    %c0 = arith.constant 0 : index
    %c0_0 = arith.constant 0 : index
    %0 = vector.load %arg1[%c0, %c0_0] : memref<24x4xf32, #tpu.memory_space<vmem>>, vector<24x4xf32>
    %c0_1 = arith.constant 0 : index
    %c0_2 = arith.constant 0 : index
    %1 = vector.load %arg2[%c0_1, %c0_2] : memref<4x32xf32, #tpu.memory_space<vmem>>, vector<4x32xf32>
    %cst = arith.constant dense<0.000000e+00> : vector<24x32xf32>
    %2 = tpu.matmul %0, %1, %cst {dimension_numbers = #tpu.dot_dimension_numbers<[1], [0], [0], [1], [0, 0, 1, 1], [], []>} : vector<24x4xf32>, vector<4x32xf32>, vector<24x32xf32> -> vector<24x32xf32>
    %3 = vector.extract_strided_slice %2 {offsets = [0, 0], sizes = [22, 8], strides = [1, 1]} : vector<24x32xf32> to vector<22x8xf32>
    %4 = vector.extract_strided_slice %2 {offsets = [1, 8], sizes = [22, 8], strides = [1, 1]} : vector<24x32xf32> to vector<22x8xf32>
    %5 = arith.addf %3, %4 : vector<22x8xf32>
    %6 = vector.extract_strided_slice %2 {offsets = [2, 16], sizes = [22, 8], strides = [1, 1]} : vector<24x32xf32> to vector<22x8xf32>
    %7 = arith.addf %5, %6 : vector<22x8xf32>
    %8 = vector.extract_strided_slice %2 {offsets = [1, 24], sizes = [22, 8], strides = [1, 1]} : vector<24x32xf32> to vector<22x8xf32>
    %c0_3 = arith.constant 0 : index
    %c0_4 = arith.constant 0 : index
    %9 = vector.load %arg7[%c0_3, %c0_4] : memref<24x1xf32, #tpu.memory_space<vmem>>, vector<24x1xf32>
    %c0_5 = arith.constant 0 : index
    %c0_6 = arith.constant 0 : index
    %10 = vector.load %arg3[%c0_5, %c0_6] : memref<1x8xf32, #tpu.memory_space<vmem>>, vector<1x8xf32>
    %11 = vector.broadcast %10 : vector<1x8xf32> to vector<22x8xf32>
    %12 = arith.addf %7, %11 : vector<22x8xf32>
    %cst_7 = arith.constant 0.000000e+00 : f32
    %13 = vector.broadcast %cst_7 : f32 to vector<22x8xf32>
    %14 = arith.maximumf %12, %13 : vector<22x8xf32>
    %15 = vector.extract_strided_slice %9 {offsets = [1, 0], sizes = [22, 1], strides = [1, 1]} : vector<24x1xf32> to vector<22x1xf32>
    %16 = vector.broadcast %15 : vector<22x1xf32> to vector<22x8xf32>
    %17 = arith.mulf %14, %16 : vector<22x8xf32>
    %cst_8 = arith.constant 0.000000e+00 : f32
    %18 = vector.broadcast %cst_8 : f32 to vector<1x8xf32>
    %c0_9 = arith.constant 0 : index
    %c0_10 = arith.constant 0 : index
    %19 = vector.load %arg9[%c0_9, %c0_10] : memref<24x8xf32, #tpu.memory_space<vmem>>, vector<1x8xf32>
    tpu.vector_store %arg9[%c0_9, %c0_10], %18 {strides = array<i32>} : memref<24x8xf32, #tpu.memory_space<vmem>>, vector<1x8xf32>,
    %c23 = arith.constant 23 : index
    %c0_11 = arith.constant 0 : index
    %20 = vector.load %arg9[%c23, %c0_11] : memref<24x8xf32, #tpu.memory_space<vmem>>, vector<1x8xf32>
    tpu.vector_store %arg9[%c23, %c0_11], %18 {strides = array<i32>} : memref<24x8xf32, #tpu.memory_space<vmem>>, vector<1x8xf32>,
    %c1 = arith.constant 1 : index
    %c0_12 = arith.constant 0 : index
    %21 = vector.load %arg9[%c1, %c0_12] : memref<24x8xf32, #tpu.memory_space<vmem>>, vector<22x8xf32>
    tpu.vector_store %arg9[%c1, %c0_12], %17 {strides = array<i32>} : memref<24x8xf32, #tpu.memory_space<vmem>>, vector<22x8xf32>,
    %c0_13 = arith.constant 0 : index
    %c0_14 = arith.constant 0 : index
    %22 = vector.load %arg9[%c0_13, %c0_14] : memref<24x8xf32, #tpu.memory_space<vmem>>, vector<24x8xf32>
    %c0_15 = arith.constant 0 : index
    %c0_16 = arith.constant 0 : index
    %23 = vector.load %arg4[%c0_15, %c0_16] : memref<8x24xf32, #tpu.memory_space<vmem>>, vector<8x24xf32>
    %cst_17 = arith.constant dense<0.000000e+00> : vector<24x24xf32>
    %24 = tpu.matmul %22, %23, %cst_17 {dimension_numbers = #tpu.dot_dimension_numbers<[1], [0], [0], [1], [0, 0, 1, 1], [], []>} : vector<24x8xf32>, vector<8x24xf32>, vector<24x24xf32> -> vector<24x24xf32>
    %25 = vector.extract_strided_slice %24 {offsets = [0, 0], sizes = [22, 8], strides = [1, 1]} : vector<24x24xf32> to vector<22x8xf32>
    %26 = vector.extract_strided_slice %24 {offsets = [1, 8], sizes = [22, 8], strides = [1, 1]} : vector<24x24xf32> to vector<22x8xf32>
    %27 = arith.addf %25, %26 : vector<22x8xf32>
    %28 = vector.extract_strided_slice %24 {offsets = [2, 16], sizes = [22, 8], strides = [1, 1]} : vector<24x24xf32> to vector<22x8xf32>
    %29 = arith.addf %27, %28 : vector<22x8xf32>
    %c0_18 = arith.constant 0 : index
    %c0_19 = arith.constant 0 : index
    %30 = vector.load %arg5[%c0_18, %c0_19] : memref<1x8xf32, #tpu.memory_space<vmem>>, vector<1x8xf32>
    %31 = vector.broadcast %30 : vector<1x8xf32> to vector<22x8xf32>
    %32 = arith.addf %29, %31 : vector<22x8xf32>
    %33 = arith.addf %32, %8 : vector<22x8xf32>
    %c0_20 = arith.constant 0 : index
    %c0_21 = arith.constant 0 : index
    %34 = vector.load %arg6[%c0_20, %c0_21] : memref<1x8xf32, #tpu.memory_space<vmem>>, vector<1x8xf32>
    %35 = vector.broadcast %34 : vector<1x8xf32> to vector<22x8xf32>
    %36 = arith.addf %33, %35 : vector<22x8xf32>
    %cst_22 = arith.constant 0.000000e+00 : f32
    %37 = vector.broadcast %cst_22 : f32 to vector<22x8xf32>
    %38 = arith.maximumf %36, %37 : vector<22x8xf32>
    %c0_23 = arith.constant 0 : index
    %c0_24 = arith.constant 0 : index
    %39 = vector.load %arg8[%c0_23, %c0_24] : memref<24x8xf32, #tpu.memory_space<vmem>>, vector<1x8xf32>
    tpu.vector_store %arg8[%c0_23, %c0_24], %18 {strides = array<i32>} : memref<24x8xf32, #tpu.memory_space<vmem>>, vector<1x8xf32>,
    %c23_25 = arith.constant 23 : index
    %c0_26 = arith.constant 0 : index
    %40 = vector.load %arg8[%c23_25, %c0_26] : memref<24x8xf32, #tpu.memory_space<vmem>>, vector<1x8xf32>
    tpu.vector_store %arg8[%c23_25, %c0_26], %18 {strides = array<i32>} : memref<24x8xf32, #tpu.memory_space<vmem>>, vector<1x8xf32>,
    %c1_27 = arith.constant 1 : index
    %c0_28 = arith.constant 0 : index
    %41 = vector.load %arg8[%c1_27, %c0_28] : memref<24x8xf32, #tpu.memory_space<vmem>>, vector<22x8xf32>
    tpu.vector_store %arg8[%c1_27, %c0_28], %38 {strides = array<i32>} : memref<24x8xf32, #tpu.memory_space<vmem>>, vector<22x8xf32>,
    return
  }
  func.func @transform_0(%arg0: i32) -> (i32, i32) {
    %c0_i32 = arith.constant 0 : i32
    %c0_i32_0 = arith.constant 0 : i32
    return %arg0, %c0_i32 : i32, i32
  }
  func.func @transform_1(%arg0: i32) -> (i32, i32) {
    %c0_i32 = arith.constant 0 : i32
    %c0_i32_0 = arith.constant 0 : i32
    %c0_i32_1 = arith.constant 0 : i32
    return %c0_i32, %c0_i32_0 : i32, i32
  }
  func.func @transform_2(%arg0: i32) -> (i32, i32) {
    %c0_i32 = arith.constant 0 : i32
    %c0_i32_0 = arith.constant 0 : i32
    %c0_i32_1 = arith.constant 0 : i32
    return %c0_i32, %c0_i32_0 : i32, i32
  }
  func.func @transform_3(%arg0: i32) -> (i32, i32) {
    %c0_i32 = arith.constant 0 : i32
    %c0_i32_0 = arith.constant 0 : i32
    %c0_i32_1 = arith.constant 0 : i32
    return %c0_i32, %c0_i32_0 : i32, i32
  }
  func.func @transform_4(%arg0: i32) -> (i32, i32) {
    %c0_i32 = arith.constant 0 : i32
    %c0_i32_0 = arith.constant 0 : i32
    %c0_i32_1 = arith.constant 0 : i32
    return %c0_i32, %c0_i32_0 : i32, i32
  }
  func.func @transform_5(%arg0: i32) -> (i32, i32) {
    %c0_i32 = arith.constant 0 : i32
    %c0_i32_0 = arith.constant 0 : i32
    %c0_i32_1 = arith.constant 0 : i32
    return %c0_i32, %c0_i32_0 : i32, i32
  }
  func.func @transform_6(%arg0: i32) -> (i32, i32) {
    %c0_i32 = arith.constant 0 : i32
    %c0_i32_0 = arith.constant 0 : i32
    %c0_i32_1 = arith.constant 0 : i32
    return %c0_i32, %c0_i32_0 : i32, i32
  }
  func.func @transform_7(%arg0: i32) -> (i32, i32) {
    %c0_i32 = arith.constant 0 : i32
    %c0_i32_0 = arith.constant 0 : i32
    return %arg0, %c0_i32 : i32, i32
  }
}

</mosaic_0001>

<llo_original>
// kernel: tpu_custom_call.1
$region0: #{tpu_custom_call.1}
  #allocation0 [shape = 'u32[]', space=smem, size = 0x4, offset = 0x4, fixed_abs, tag = 'smem constant byte address 0x4 - core index']
  #allocation1 [shape = 'u32[144,128]{1,0:T(1,128)}', space=vmem, size = 0x12000, scoped, tag = 'internal scratch']
  #allocation2 [shape = 'f32[24,8]{1,0:T(8,128)}', space=vmem, size = 0x3000, scoped, tag = 'scratch operand']
  %s0 = inlined_call_operand.vmem [shape: f32[48,4], index: 0, kind: input, shape index: {}]
  %s1 = inlined_call_operand.vmem [shape: f32[4,32], index: 1, kind: input, shape index: {}]
  %s2 = inlined_call_operand.vmem [shape: f32[1,8], index: 2, kind: input, shape index: {}]
  %s3 = inlined_call_operand.vmem [shape: f32[8,24], index: 3, kind: input, shape index: {}]
  %s4 = inlined_call_operand.vmem [shape: f32[1,8], index: 4, kind: input, shape index: {}]
  %s5 = inlined_call_operand.vmem [shape: f32[1,8], index: 5, kind: input, shape index: {}]
  %s6 = inlined_call_operand.vmem [shape: f32[24,1], index: 6, kind: input, shape index: {}]
  %s7 = inlined_call_operand.vmem [shape: f32[48,8], index: 7, kind: output, shape index: {}]
  %s8 = sld [smem:[#allocation0]]
  $region61: #{tpu_custom_call.1} parent=0
    _
  %s10 = ssub.s32 1, %s8
  %s11 = scalar_select 0, %s10, %s8
  loop: start=0, step=1, limit=4
  $region2: #{tpu_custom_call.1} parent=0 // loop_pre_header
    _
  $region3: #{tpu_custom_call.1} parent=0 // loop_header
    %s13 = sphi 0, %s17
    %p14 = scmp.ge.s32.totalorder %s13, 4
    %s23 = sphi 0, %s25
    %s26 = sphi 0, %s23
    %s27 = sphi 0, %s26
    %s43 = sphi 0, %s27
    %s47 = sphi 0, %s47
    %s49 = sphi 0, %s47
    %s50 = sphi 0, %s49
    %s64 = sphi 0, %s50
    %s68 = sphi 0, %s68
    %s70 = sphi 0, %s68
    %s71 = sphi 0, %s70
    %s85 = sphi 0, %s71
    %s89 = sphi 0, %s89
    %s91 = sphi 0, %s89
    %s92 = sphi 0, %s91
    %s106 = sphi 0, %s92
    %s110 = sphi 0, %s110
    %s112 = sphi 0, %s110
    %s113 = sphi 0, %s112
    %s127 = sphi 0, %s113
    %s131 = sphi 0, %s131
    %s133 = sphi 0, %s131
    %s134 = sphi 0, %s133
    %s148 = sphi 0, %s134
    %s152 = sphi 0, %s152
    %s154 = sphi 0, %s152
    %s155 = sphi 0, %s154
    %s169 = sphi 0, %s155
    %s175 = sphi 0, %s177
    %s178 = sphi 0, %s175
    %s179 = sphi 0, %s178
    %s195 = sphi 0, %s179
  $region4: #{tpu_custom_call.1} parent=0 // loop_header_branch
    %16 = sbr.rel (%p14) target = $region8
  $region5: #{tpu_custom_call.1} parent=0 // loop_body
    %s18 = ssub.s32 %s13, 1
    %s19 = ssub.s32 %s13, 2
    %s20 = sadd.s32 %s13, 1
    %s21 = ssub.s32 %s13, %s20
    %p22 = scmp.eq.s32.totalorder %s21, 0
    %s24 = sadd.s32 %s23, 1
    %s25 = scalar_select %p22, %s23, %s24
    %p28 = pneg %p22
    %p29 = scmp.eq.s32.totalorder %s13, 1
    %p30 = por %p28, %p29
    %p31 = scmp.ne.s32.totalorder %s23, %s26
    %p32 = scmp.eq.s32.totalorder %s13, 0
    %p33 = por %p31, %p32
    %p34 = scmp.ne.s32.totalorder %s23, %s26
    %p35 = scmp.eq.s32.totalorder %s18, 1
    %p36 = por %p34, %p35
    %p37 = scmp.ne.s32.totalorder %s26, %s27
    %p38 = scmp.eq.s32.totalorder %s18, 0
    %p39 = por %p37, %p38
    %p40 = scmp.ne.s32.totalorder %s26, %s27
    %p41 = scmp.eq.s32.totalorder %s19, 1
    %p42 = por %p40, %p41
    %p44 = scmp.ne.s32.totalorder %s27, %s43
    %p45 = scmp.eq.s32.totalorder %s19, 0
    %p46 = por %p44, %p45
    %s48 = sadd.s32 %s47, 1
    %p51 = scmp.eq.s32.totalorder %s13, 1
    %p52 = scmp.ne.s32.totalorder %s47, %s49
    %p53 = scmp.eq.s32.totalorder %s13, 0
    %p54 = por %p52, %p53
    %p55 = scmp.ne.s32.totalorder %s47, %s49
    %p56 = scmp.eq.s32.totalorder %s18, 1
    %p57 = por %p55, %p56
    %p58 = scmp.ne.s32.totalorder %s49, %s50
    %p59 = scmp.eq.s32.totalorder %s18, 0
    %p60 = por %p58, %p59
    %p61 = scmp.ne.s32.totalorder %s49, %s50
    %p62 = scmp.eq.s32.totalorder %s19, 1
    %p63 = por %p61, %p62
    %p65 = scmp.ne.s32.totalorder %s50, %s64
    %p66 = scmp.eq.s32.totalorder %s19, 0
    %p67 = por %p65, %p66
    %s69 = sadd.s32 %s68, 1
    %p72 = scmp.eq.s32.totalorder %s13, 1
    %p73 = scmp.ne.s32.totalorder %s68, %s70
    %p74 = scmp.eq.s32.totalorder %s13, 0
    %p75 = por %p73, %p74
    %p76 = scmp.ne.s32.totalorder %s68, %s70
    %p77 = scmp.eq.s32.totalorder %s18, 1
    %p78 = por %p76, %p77
    %p79 = scmp.ne.s32.totalorder %s70, %s71
    %p80 = scmp.eq.s32.totalorder %s18, 0
    %p81 = por %p79, %p80
    %p82 = scmp.ne.s32.totalorder %s70, %s71
    %p83 = scmp.eq.s32.totalorder %s19, 1
    %p84 = por %p82, %p83
    %p86 = scmp.ne.s32.totalorder %s71, %s85
    %p87 = scmp.eq.s32.totalorder %s19, 0
    %p88 = por %p86, %p87
    %s90 = sadd.s32 %s89, 1
    %p93 = scmp.eq.s32.totalorder %s13, 1
    %p94 = scmp.ne.s32.totalorder %s89, %s91
    %p95 = scmp.eq.s32.totalorder %s13, 0
    %p96 = por %p94, %p95
    %p97 = scmp.ne.s32.totalorder %s89, %s91
    %p98 = scmp.eq.s32.totalorder %s18, 1
    %p99 = por %p97, %p98
    %p100 = scmp.ne.s32.totalorder %s91, %s92
    %p101 = scmp.eq.s32.totalorder %s18, 0
    %p102 = por %p100, %p101
    %p103 = scmp.ne.s32.totalorder %s91, %s92
    %p104 = scmp.eq.s32.totalorder %s19, 1
    %p105 = por %p103, %p104
    %p107 = scmp.ne.s32.totalorder %s92, %s106
    %p108 = scmp.eq.s32.totalorder %s19, 0
    %p109 = por %p107, %p108
    %s111 = sadd.s32 %s110, 1
    %p114 = scmp.eq.s32.totalorder %s13, 1
    %p115 = scmp.ne.s32.totalorder %s110, %s112
    %p116 = scmp.eq.s32.totalorder %s13, 0
    %p117 = por %p115, %p116
    %p118 = scmp.ne.s32.totalorder %s110, %s112
    %p119 = scmp.eq.s32.totalorder %s18, 1
    %p120 = por %p118, %p119
    %p121 = scmp.ne.s32.totalorder %s112, %s113
    %p122 = scmp.eq.s32.totalorder %s18, 0
    %p123 = por %p121, %p122
    %p124 = scmp.ne.s32.totalorder %s112, %s113
    %p125 = scmp.eq.s32.totalorder %s19, 1
    %p126 = por %p124, %p125
    %p128 = scmp.ne.s32.totalorder %s113, %s127
    %p129 = scmp.eq.s32.totalorder %s19, 0
    %p130 = por %p128, %p129
    %s132 = sadd.s32 %s131, 1
    %p135 = scmp.eq.s32.totalorder %s13, 1
    %p136 = scmp.ne.s32.totalorder %s131, %s133
    %p137 = scmp.eq.s32.totalorder %s13, 0
    %p138 = por %p136, %p137
    %p139 = scmp.ne.s32.totalorder %s131, %s133
    %p140 = scmp.eq.s32.totalorder %s18, 1
    %p141 = por %p139, %p140
    %p142 = scmp.ne.s32.totalorder %s133, %s134
    %p143 = scmp.eq.s32.totalorder %s18, 0
    %p144 = por %p142, %p143
    %p145 = scmp.ne.s32.totalorder %s133, %s134
    %p146 = scmp.eq.s32.totalorder %s19, 1
    %p147 = por %p145, %p146
    %p149 = scmp.ne.s32.totalorder %s134, %s148
    %p150 = scmp.eq.s32.totalorder %s19, 0
    %p151 = por %p149, %p150
    %s153 = sadd.s32 %s152, 1
    %p156 = scmp.eq.s32.totalorder %s13, 1
    %p157 = scmp.ne.s32.totalorder %s152, %s154
    %p158 = scmp.eq.s32.totalorder %s13, 0
    %p159 = por %p157, %p158
    %p160 = scmp.ne.s32.totalorder %s152, %s154
    %p161 = scmp.eq.s32.totalorder %s18, 1
    %p162 = por %p160, %p161
    %p163 = scmp.ne.s32.totalorder %s154, %s155
    %p164 = scmp.eq.s32.totalorder %s18, 0
    %p165 = por %p163, %p164
    %p166 = scmp.ne.s32.totalorder %s154, %s155
    %p167 = scmp.eq.s32.totalorder %s19, 1
    %p168 = por %p166, %p167
    %p170 = scmp.ne.s32.totalorder %s155, %s169
    %p171 = scmp.eq.s32.totalorder %s19, 0
    %p172 = por %p170, %p171
    %s173 = ssub.s32 %s13, %s20
    %p174 = scmp.eq.s32.totalorder %s173, 0
    %s176 = sadd.s32 %s175, 1
    %s177 = scalar_select %p174, %s175, %s176
    %p180 = pneg %p174
    %p181 = scmp.eq.s32.totalorder %s13, 1
    %p182 = por %p180, %p181
    %p183 = scmp.ne.s32.totalorder %s175, %s178
    %p184 = scmp.eq.s32.totalorder %s13, 0
    %p185 = por %p183, %p184
    %p186 = scmp.ne.s32.totalorder %s175, %s178
    %p187 = scmp.eq.s32.totalorder %s18, 1
    %p188 = por %p186, %p187
    %p189 = scmp.ne.s32.totalorder %s178, %s179
    %p190 = scmp.eq.s32.totalorder %s18, 0
    %p191 = por %p189, %p190
    %p192 = scmp.ne.s32.totalorder %s178, %s179
    %p193 = scmp.eq.s32.totalorder %s19, 1
    %p194 = por %p192, %p193
    %p196 = scmp.ne.s32.totalorder %s179, %s195
    %p197 = scmp.eq.s32.totalorder %s19, 0
    %p198 = por %p196, %p197
    %p199 = scmp.le.s32.totalorder 1, %s13
    %p200 = scmp.lt.s32.totalorder %s13, 3
    %p201 = pnand %p199, %p200
    %p202 = pneg %p201
    // Predicated region
    $region9: #{tpu_custom_call.1} parent=5 // pred_check
      _
    $region10: #{tpu_custom_call.1} parent=5 // pred_check_branch
      %204 = sbr.rel (%p201) target = $region12
    $region11: #{tpu_custom_call.1} parent=5 // pred_region
      %s205 = ssub.s32 %s13, 1
      // Predicated region
      $region13: #{tpu_custom_call.1} parent=11 // pred_check
        %p206 = pneg %p60
      $region14: #{tpu_custom_call.1} parent=11 // pred_check_branch
        %208 = sbr.rel (%p206) target = $region16
      $region15: #{tpu_custom_call.1} parent=11 // pred_region
        _
      $region16: #{tpu_custom_call.1} parent=11 // pred_fallthru
        _
      // Predicated region
      $region17: #{tpu_custom_call.1} parent=11 // pred_check
        %p209 = pneg %p81
      $region18: #{tpu_custom_call.1} parent=11 // pred_check_branch
        %211 = sbr.rel (%p209) target = $region20
      $region19: #{tpu_custom_call.1} parent=11 // pred_region
        _
      $region20: #{tpu_custom_call.1} parent=11 // pred_fallthru
        _
      // Predicated region
      $region21: #{tpu_custom_call.1} parent=11 // pred_check
        %p212 = pneg %p102
      $region22: #{tpu_custom_call.1} parent=11 // pred_check_branch
        %214 = sbr.rel (%p212) target = $region24
      $region23: #{tpu_custom_call.1} parent=11 // pred_region
        _
      $region24: #{tpu_custom_call.1} parent=11 // pred_fallthru
        _
      // Predicated region
      $region25: #{tpu_custom_call.1} parent=11 // pred_check
        %p215 = pneg %p123
      $region26: #{tpu_custom_call.1} parent=11 // pred_check_branch
        %217 = sbr.rel (%p215) target = $region28
      $region27: #{tpu_custom_call.1} parent=11 // pred_region
        _
      $region28: #{tpu_custom_call.1} parent=11 // pred_fallthru
        _
      // Predicated region
      $region29: #{tpu_custom_call.1} parent=11 // pred_check
        %p218 = pneg %p144
      $region30: #{tpu_custom_call.1} parent=11 // pred_check_branch
        %220 = sbr.rel (%p218) target = $region32
      $region31: #{tpu_custom_call.1} parent=11 // pred_region
        _
      $region32: #{tpu_custom_call.1} parent=11 // pred_fallthru
        _
      // Predicated region
      $region33: #{tpu_custom_call.1} parent=11 // pred_check
        %p221 = pneg %p165
      $region34: #{tpu_custom_call.1} parent=11 // pred_check_branch
        %223 = sbr.rel (%p221) target = $region36
      $region35: #{tpu_custom_call.1} parent=11 // pred_region
        _
      $region36: #{tpu_custom_call.1} parent=11 // pred_fallthru
        _
    $region12: #{tpu_custom_call.1} parent=5 // pred_fallthru
      _
    %p224 = scmp.lt.s32.totalorder %s13, 2
    // Predicated region
    $region37: #{tpu_custom_call.1} parent=5 // pred_check
      %p225 = pneg %p224
    $region38: #{tpu_custom_call.1} parent=5 // pred_check_branch
      %227 = sbr.rel (%p225) target = $region40
    $region39: #{tpu_custom_call.1} parent=5 // pred_region
      // Predicated region
      $region41: #{tpu_custom_call.1} parent=39 // pred_check
        %p228 = pneg %p33
      $region42: #{tpu_custom_call.1} parent=39 // pred_check_branch
        %230 = sbr.rel (%p228) target = $region44
      $region43: #{tpu_custom_call.1} parent=39 // pred_region
        %s231 = smul.u32 3, %s13
        %p232 = scmp.lt.s32.totalorder %s231, 5
        %s233 = scalar_select %p232, %s231, 5
        %s234 = smul.addr %s233, 8
        %s235 = scalar_lea.vmem %s0, %s234
        %s236 = smul.u32 3, %s13
      $region44: #{tpu_custom_call.1} parent=39 // pred_fallthru
        _
    $region40: #{tpu_custom_call.1} parent=5 // pred_fallthru
      _
    %p237 = scmp.le.s32.totalorder 1, %s13
    %p238 = scmp.lt.s32.totalorder %s13, 3
    %p239 = pnand %p237, %p238
    %p240 = pneg %p239
    // Predicated region
    $region45: #{tpu_custom_call.1} parent=5 // pred_check
      _
    $region46: #{tpu_custom_call.1} parent=5 // pred_check_branch
      %242 = sbr.rel (%p239) target = $region48
    $region47: #{tpu_custom_call.1} parent=5 // pred_region
      %s243 = ssub.s32 %s13, 1
      %s244 = smul.u32 3, %s18
      %p245 = scmp.lt.s32.totalorder %s244, 5
      %s246 = scalar_select %p245, %s244, 5
      %s247 = smul.addr %s246, 8
      %s248 = scalar_lea.vmem %s0, %s247
      %p249 = pneg %p39
      %p250 = pneg %p36
      %p251 = pneg %p60
      %p252 = pneg %p57
      %p253 = pneg %p81
      %p254 = pneg %p78
      %p255 = pneg %p102
      %p256 = pneg %p99
      %p257 = pneg %p123
      %p258 = pneg %p120
      %p259 = pneg %p144
      %p260 = pneg %p141
      %p261 = pneg %p165
      %p262 = pneg %p162
      %p263 = pneg %p191
      %p264 = pneg %p188
      %s265 = smul.u32 3, %s18
      %p266 = scmp.lt.s32.totalorder %s265, 5
      %s267 = scalar_select %p266, %s265, 5
      %s268 = smul.addr %s267, 8
      %s269 = scalar_lea.vmem %s7, %s268
      %s270 = smul.u32 3, %s18
      %p271 = scmp.lt.s32.totalorder %s270, 5
      %s272 = scalar_select %p271, %s270, 5
      %s273 = smul.addr %s272, 8
      %s274 = scalar_lea.vmem %s0, %s273
      %s275 = smul.u32 3, %s18
      %s276 = smul.u32 3, %s18
      %p277 = scmp.lt.s32.totalorder %s276, 5
      %s278 = scalar_select %p277, %s276, 5
      %s279 = smul.addr %s278, 8
      %s280 = scalar_lea.vmem %s7, %s279
      %s281 = smul.u32 3, %s18
      %v282 = vld [vmem:[%s274] sm:$0xff]
      %v283 = vld [vmem:[%s274 + $0x8] sm:$0xff]
      %v284 = vld [vmem:[%s274 + $0x10] sm:$0xff]
      %v285 = vld [vmem:[%s1] sm:$0xf]
      %vm286 = vcmask 31744
      %v288 = vsel %vm286, %v282, 0
      %v291 = vsel %vm286, %v283, 0
      %v294 = vsel %vm286, %v284, 0
      %vm296 = vcmask 1043456
      %v298 = vsel %vm296, %v285, 0
      %300 = vmatprep.subr.mxu0 0.0
      %301 = vmatpush1.msra.mxu0 %v298
      %302 = vmatprep.subr.mxu0 0.0
      %303 = vmatpush1.msra.mxu0 0.0
      %304 = vmatprep.subr.mxu0 0.0
      %305 = vmatpush1.msra.mxu0 0.0
      %306 = vmatprep.subr.mxu0 0.0
      %307 = vmatpush1.msra.mxu0 0.0
      %308 = vmatprep.subr.mxu0 0.0
      %309 = vmatpush1.msra.mxu0 0.0
      %310 = vmatprep.subr.mxu0 0.0
      %311 = vmatpush1.msra.mxu0 0.0
      %312 = vmatprep.subr.mxu0 0.0
      %313 = vmatpush1.msra.mxu0 0.0
      %314 = vmatprep.subr.mxu0 0.0
      %315 = vmatpush1.msra.mxu0 0.0
      %316 = vmatprep.subr.mxu0 0.0
      %317 = vmatpush1.msra.mxu0 0.0
      %318 = vmatprep.subr.mxu0 0.0
      %319 = vmatpush1.msra.mxu0 0.0
      %320 = vmatprep.subr.mxu0 0.0
      %321 = vmatpush1.msra.mxu0 0.0
      %322 = vmatprep.subr.mxu0 0.0
      %323 = vmatpush1.msra.mxu0 0.0
      %324 = vmatprep.subr.mxu0 0.0
      %325 = vmatpush1.msra.mxu0 0.0
      %326 = vmatprep.subr.mxu0 0.0
      %327 = vmatpush1.msra.mxu0 0.0
      %328 = vmatprep.subr.mxu0 0.0
      %329 = vmatpush1.msra.mxu0 0.0
      %330 = vmatprep.subr.mxu0 0.0
      %331 = vmatpush1.msra.mxu0 0.0
      %332 = vmatprep.subr.mxu0 0.0
      %333 = vmatpush1.msra.mxu0 0.0
      %334 = vmatprep.subr.mxu0 0.0
      %335 = vmatpush1.msra.mxu0 0.0
      %336 = vmatprep.subr.mxu0 0.0
      %337 = vmatpush1.msra.mxu0 0.0
      %338 = vmatprep.subr.mxu0 0.0
      %339 = vmatpush1.msra.mxu0 0.0
      %340 = vmatprep.subr.mxu0 0.0
      %341 = vmatpush1.msra.mxu0 0.0
      %342 = vmatprep.subr.mxu0 0.0
      %343 = vmatpush1.msra.mxu0 0.0
      %344 = vmatprep.subr.mxu0 0.0
      %345 = vmatpush1.msra.mxu0 0.0
      %346 = vmatprep.subr.mxu0 0.0
      %347 = vmatpush1.msra.mxu0 0.0
      %348 = vmatprep.subr.mxu0 0.0
      %349 = vmatpush1.msra.mxu0 0.0
      %350 = vmatprep.subr.mxu0 0.0
      %351 = vmatpush1.msra.mxu0 0.0
      %352 = vmatprep.subr.mxu0 0.0
      %353 = vmatpush1.msra.mxu0 0.0
      %354 = vmatprep.subr.mxu0 0.0
      %355 = vmatpush1.msra.mxu0 0.0
      %356 = vmatprep.subr.mxu0 0.0
      %357 = vmatpush1.msra.mxu0 0.0
      %358 = vmatprep.subr.mxu0 0.0
      %359 = vmatpush1.msra.mxu0 0.0
      %360 = vmatprep.subr.mxu0 0.0
      %361 = vmatpush1.msra.mxu0 0.0
      %362 = vmatprep.subr.mxu0 0.0
      %363 = vmatpush1.msra.mxu0 0.0
      %364 = vmatprep.mubr.f32.mxu0 0.0
      %365 = vmatmul.mubr.f32.gmra.mrb[0].mxu0 %v288
      %v366 = vpop.f32.mrb[0].mxu0
      %v367 = vadd.f32 0.0, %v366
      %v368 = vpop.f32.mrb[0].mxu0
      %369 = vmatprep.mubr.f32.mxu0 0.0
      %370 = vmatmul.mubr.f32.gmra.mrb[0].mxu0 %v291
      %v371 = vpop.f32.mrb[0].mxu0
      %v372 = vadd.f32 0.0, %v371
      %v373 = vpop.f32.mrb[0].mxu0
      %374 = vmatprep.mubr.f32.mxu0 0.0
      %375 = vmatmul.mubr.f32.gmra.mrb[0].mxu0 %v294
      %v376 = vpop.f32.mrb[0].mxu0
      %v377 = vadd.f32 0.0, %v376
      %v378 = vpop.f32.mrb[0].mxu0
      %379 = vdwg.mxu0
      %vm383 = vcmask 1046528
      %v384 = vrot.slane %v367, 1
      %v385 = vrot.slane %v372, 1
      %v386 = vsel %vm383, %v384, %v385
      %v387 = vrot.slane %v377, 1
      %v388 = vsel %vm383, %v385, %v387
      %389 = vrot.lane.b32.xlu0 %v386, 120
      %v390 = vpop.permute.xlu0 %389
      %391 = vrot.lane.b32.xlu0 %v388, 120
      %v392 = vpop.permute.xlu0 %391
      %393 = vrot.lane.b32.xlu0 %v387, 120
      %v394 = vpop.permute.xlu0 %393
      %v398 = vadd.f32 %v367, %v390
      %v399 = vadd.f32 %v372, %v392
      %v400 = vadd.f32 %v377, %v394
      %vm401 = vcmask 1045504
      %v402 = vrot.slane %v367, 2
      %v403 = vrot.slane %v372, 2
      %v404 = vsel %vm401, %v402, %v403
      %v405 = vrot.slane %v377, 2
      %v406 = vsel %vm401, %v403, %v405
      %407 = vrot.lane.b32.xlu0 %v404, 112
      %v408 = vpop.permute.xlu0 %407
      %409 = vrot.lane.b32.xlu0 %v406, 112
      %v410 = vpop.permute.xlu0 %409
      %411 = vrot.lane.b32.xlu0 %v405, 112
      %v412 = vpop.permute.xlu0 %411
      %v416 = vadd.f32 %v398, %v408
      %v417 = vadd.f32 %v399, %v410
      %v418 = vadd.f32 %v400, %v412
      %v419 = vld [vmem:[%s6] sm:$0xff]
      %v420 = vld [vmem:[%s6 + $0x8] sm:$0xff]
      %v421 = vld [vmem:[%s6 + $0x10] sm:$0xff]
      %v422 = vld [vmem:[%s2] sm:$0x1]
      %v424 = vlaneseq
      %v425 = vshrl.u32 %v424, 7
      %v426 = vsub.s32 0, %v425
      %v427 = vrot.slane %v422, %v426
      %v429 = vadd.f32 %v416, %v427
      %v430 = vadd.f32 %v417, %v427
      %v431 = vadd.f32 %v418, %v427
      %v432 = vmax.f32 %v429, 0.0
      %v433 = vmax.f32 %v430, 0.0
      %v434 = vmax.f32 %v431, 0.0
      %436 = vset.pattern.permute.xlu0 0
      %437 = vperm.xlu0 %436, %v419
      %v438 = vpop.permute.xlu0 %437
      %440 = vset.pattern.permute.xlu0 0
      %441 = vperm.xlu0 %440, %v420
      %v442 = vpop.permute.xlu0 %441
      %444 = vset.pattern.permute.xlu0 0
      %445 = vperm.xlu0 %444, %v421
      %v446 = vpop.permute.xlu0 %445
      %v447 = vrot.slane %v438, 1
      %v448 = vrot.slane %v442, 1
      %v449 = vsel %vm383, %v447, %v448
      %v450 = vrot.slane %v446, 1
      %v451 = vsel %vm383, %v448, %v450
      %v455 = vmul.f32 %v432, %v449
      %v456 = vmul.f32 %v433, %v451
      %v457 = vmul.f32 %v434, %v450
      %vm458 = vcmask 57344
      %459 = vst.msk [vmem:[#allocation2] sm:$0x1] %vm458, 0.0
      %460 = vst.msk [vmem:[#allocation2 + $0x17] sm:$0x1] %vm458, 0.0
      %vm461 = vcmask 64512
      %462 = vst.msk [vmem:[#allocation2 + $0x1] sm:$0xff] %vm461, %v455
      %463 = vst.msk [vmem:[#allocation2 + $0x9] sm:$0xff] %vm461, %v456
      %vm464 = vcmask 62464
      %465 = vst.msk [vmem:[#allocation2 + $0x11] sm:$0x3f] %vm464, %v457
      %v466 = vld [vmem:[#allocation2] sm:$0xff]
      %v467 = vld [vmem:[#allocation2 + $0x8] sm:$0xff]
      %v468 = vld [vmem:[#allocation2 + $0x10] sm:$0xff]
      %v469 = vld [vmem:[%s3] sm:$0xff]
      %v471 = vsel %vm461, %v466, 0
      %v474 = vsel %vm461, %v467, 0
      %v477 = vsel %vm461, %v468, 0
      %479 = vmatprep.subr.mxu0 0.0
      %480 = vmatpush1.msra.mxu0 %v469
      %481 = vmatprep.subr.mxu0 0.0
      %482 = vmatpush1.msra.mxu0 0.0
      %483 = vmatprep.subr.mxu0 0.0
      %484 = vmatpush1.msra.mxu0 0.0
      %485 = vmatprep.subr.mxu0 0.0
      %486 = vmatpush1.msra.mxu0 0.0
      %487 = vmatprep.subr.mxu0 0.0
      %488 = vmatpush1.msra.mxu0 0.0
      %489 = vmatprep.subr.mxu0 0.0
      %490 = vmatpush1.msra.mxu0 0.0
      %491 = vmatprep.subr.mxu0 0.0
      %492 = vmatpush1.msra.mxu0 0.0
      %493 = vmatprep.subr.mxu0 0.0
      %494 = vmatpush1.msra.mxu0 0.0
      %495 = vmatprep.subr.mxu0 0.0
      %496 = vmatpush1.msra.mxu0 0.0
      %497 = vmatprep.subr.mxu0 0.0
      %498 = vmatpush1.msra.mxu0 0.0
      %499 = vmatprep.subr.mxu0 0.0
      %500 = vmatpush1.msra.mxu0 0.0
      %501 = vmatprep.subr.mxu0 0.0
      %502 = vmatpush1.msra.mxu0 0.0
      %503 = vmatprep.subr.mxu0 0.0
      %504 = vmatpush1.msra.mxu0 0.0
      %505 = vmatprep.subr.mxu0 0.0
      %506 = vmatpush1.msra.mxu0 0.0
      %507 = vmatprep.subr.mxu0 0.0
      %508 = vmatpush1.msra.mxu0 0.0
      %509 = vmatprep.subr.mxu0 0.0
      %510 = vmatpush1.msra.mxu0 0.0
      %511 = vmatprep.subr.mxu0 0.0
      %512 = vmatpush1.msra.mxu0 0.0
      %513 = vmatprep.subr.mxu0 0.0
      %514 = vmatpush1.msra.mxu0 0.0
      %515 = vmatprep.subr.mxu0 0.0
      %516 = vmatpush1.msra.mxu0 0.0
      %517 = vmatprep.subr.mxu0 0.0
      %518 = vmatpush1.msra.mxu0 0.0
      %519 = vmatprep.subr.mxu0 0.0
      %520 = vmatpush1.msra.mxu0 0.0
      %521 = vmatprep.subr.mxu0 0.0
      %522 = vmatpush1.msra.mxu0 0.0
      %523 = vmatprep.subr.mxu0 0.0
      %524 = vmatpush1.msra.mxu0 0.0
      %525 = vmatprep.subr.mxu0 0.0
      %526 = vmatpush1.msra.mxu0 0.0
      %527 = vmatprep.subr.mxu0 0.0
      %528 = vmatpush1.msra.mxu0 0.0
      %529 = vmatprep.subr.mxu0 0.0
      %530 = vmatpush1.msra.mxu0 0.0
      %531 = vmatprep.subr.mxu0 0.0
      %532 = vmatpush1.msra.mxu0 0.0
      %533 = vmatprep.subr.mxu0 0.0
      %534 = vmatpush1.msra.mxu0 0.0
      %535 = vmatprep.subr.mxu0 0.0
      %536 = vmatpush1.msra.mxu0 0.0
      %537 = vmatprep.subr.mxu0 0.0
      %538 = vmatpush1.msra.mxu0 0.0
      %539 = vmatprep.subr.mxu0 0.0
      %540 = vmatpush1.msra.mxu0 0.0
      %541 = vmatprep.subr.mxu0 0.0
      %542 = vmatpush1.msra.mxu0 0.0
      %543 = vmatprep.mubr.f32.mxu0 0.0
      %544 = vmatmul.mubr.f32.gmra.mrb[0].mxu0 %v471
      %v545 = vpop.f32.mrb[0].mxu0
      %v546 = vadd.f32 0.0, %v545
      %v547 = vpop.f32.mrb[0].mxu0
      %548 = vmatprep.mubr.f32.mxu0 0.0
      %549 = vmatmul.mubr.f32.gmra.mrb[0].mxu0 %v474
      %v550 = vpop.f32.mrb[0].mxu0
      %v551 = vadd.f32 0.0, %v550
      %v552 = vpop.f32.mrb[0].mxu0
      %553 = vmatprep.mubr.f32.mxu0 0.0
      %554 = vmatmul.mubr.f32.gmra.mrb[0].mxu0 %v477
      %v555 = vpop.f32.mrb[0].mxu0
      %v556 = vadd.f32 0.0, %v555
      %v557 = vpop.f32.mrb[0].mxu0
      %558 = vdwg.mxu0
      %v562 = vrot.slane %v546, 1
      %v563 = vrot.slane %v551, 1
      %v564 = vsel %vm383, %v562, %v563
      %v565 = vrot.slane %v556, 1
      %v566 = vsel %vm383, %v563, %v565
      %567 = vrot.lane.b32.xlu0 %v564, 120
      %v568 = vpop.permute.xlu0 %567
      %569 = vrot.lane.b32.xlu0 %v566, 120
      %v570 = vpop.permute.xlu0 %569
      %571 = vrot.lane.b32.xlu0 %v565, 120
      %v572 = vpop.permute.xlu0 %571
      %v576 = vadd.f32 %v546, %v568
      %v577 = vadd.f32 %v551, %v570
      %v578 = vadd.f32 %v556, %v572
      %v579 = vrot.slane %v546, 2
      %v580 = vrot.slane %v551, 2
      %v581 = vsel %vm401, %v579, %v580
      %v582 = vrot.slane %v556, 2
      %v583 = vsel %vm401, %v580, %v582
      %584 = vrot.lane.b32.xlu0 %v581, 112
      %v585 = vpop.permute.xlu0 %584
      %586 = vrot.lane.b32.xlu0 %v583, 112
      %v587 = vpop.permute.xlu0 %586
      %588 = vrot.lane.b32.xlu0 %v582, 112
      %v589 = vpop.permute.xlu0 %588
      %v593 = vadd.f32 %v576, %v585
      %v594 = vadd.f32 %v577, %v587
      %v595 = vadd.f32 %v578, %v589
      %v596 = vld [vmem:[%s4] sm:$0x1]
      %v598 = vlaneseq
      %v599 = vshrl.u32 %v598, 7
      %v600 = vsub.s32 0, %v599
      %v601 = vrot.slane %v596, %v600
      %v603 = vadd.f32 %v593, %v601
      %v604 = vadd.f32 %v594, %v601
      %v605 = vadd.f32 %v595, %v601
      %606 = vrot.lane.b32.xlu0 %v386, 104
      %v607 = vpop.permute.xlu0 %606
      %608 = vrot.lane.b32.xlu0 %v388, 104
      %v609 = vpop.permute.xlu0 %608
      %610 = vrot.lane.b32.xlu0 %v387, 104
      %v611 = vpop.permute.xlu0 %610
      %v615 = vadd.f32 %v603, %v607
      %v616 = vadd.f32 %v604, %v609
      %v617 = vadd.f32 %v605, %v611
      %v618 = vld [vmem:[%s5] sm:$0x1]
      %v620 = vlaneseq
      %v621 = vshrl.u32 %v620, 7
      %v622 = vsub.s32 0, %v621
      %v623 = vrot.slane %v618, %v622
      %v625 = vadd.f32 %v615, %v623
      %v626 = vadd.f32 %v616, %v623
      %v627 = vadd.f32 %v617, %v623
      %v628 = vmax.f32 %v625, 0.0
      %v629 = vmax.f32 %v626, 0.0
      %v630 = vmax.f32 %v627, 0.0
      %631 = vst.msk [vmem:[%s280] sm:$0x1] %vm458, 0.0
      %632 = vst.msk [vmem:[%s280 + $0x17] sm:$0x1] %vm458, 0.0
      %633 = vst.msk [vmem:[%s280 + $0x1] sm:$0xff] %vm461, %v628
      %634 = vst.msk [vmem:[%s280 + $0x9] sm:$0xff] %vm461, %v629
      %635 = vst.msk [vmem:[%s280 + $0x11] sm:$0x3f] %vm464, %v630
      %s636 = smul.u32 3, %s18
      %p637 = scmp.lt.s32.totalorder %s636, 5
      %s638 = scalar_select %p637, %s636, 5
      %s639 = smul.addr %s638, 8
      %s640 = scalar_lea.vmem %s7, %s639
      // Predicated region
      $region49: #{tpu_custom_call.1} parent=47 // pred_check
        %p641 = pneg %p188
      $region50: #{tpu_custom_call.1} parent=47 // pred_check_branch
        %643 = sbr.rel (%p641) target = $region52
      $region51: #{tpu_custom_call.1} parent=47 // pred_region
        %s644 = smul.u32 3, %s18
      $region52: #{tpu_custom_call.1} parent=47 // pred_fallthru
        _
    $region48: #{tpu_custom_call.1} parent=5 // pred_fallthru
      _
    %p645 = scmp.le.s32.totalorder 2, %s13
    // Predicated region
    $region53: #{tpu_custom_call.1} parent=5 // pred_check
      %p646 = pneg %p645
    $region54: #{tpu_custom_call.1} parent=5 // pred_check_branch
      %648 = sbr.rel (%p646) target = $region56
    $region55: #{tpu_custom_call.1} parent=5 // pred_region
      %s649 = ssub.s32 %s13, 2
      // Predicated region
      $region57: #{tpu_custom_call.1} parent=55 // pred_check
        %p650 = pneg %p194
      $region58: #{tpu_custom_call.1} parent=55 // pred_check_branch
        %652 = sbr.rel (%p650) target = $region60
      $region59: #{tpu_custom_call.1} parent=55 // pred_region
        %s653 = smul.u32 3, %s19
        %p654 = scmp.lt.s32.totalorder %s653, 5
        %s655 = scalar_select %p654, %s653, 5
        %s656 = smul.addr %s655, 8
        %s657 = scalar_lea.vmem %s7, %s656
      $region60: #{tpu_custom_call.1} parent=55 // pred_fallthru
        _
    $region56: #{tpu_custom_call.1} parent=5 // pred_fallthru
      _
  $region6: #{tpu_custom_call.1} parent=0 // loop_footer
    %s17 = sadd.s32 1, %s13
  $region7: #{tpu_custom_call.1} parent=0 // loop_footer_branch
    %12 = sbr.rel target = $region3
  $region8: #{tpu_custom_call.1} parent=0 // loop_exit
    _

</llo_original>
